<compile_context>
chip_gen: v7x
topology: tpu7x:2x2x1
jax: 0.10.0
libtpu: 0.0.40
codegen_flags: <defaults>
</compile_context>

<pallas_src>
import math

import jax
import jax.numpy as jnp
from jax.experimental import pallas as pl
from jax.experimental.pallas import tpu as pltpu

_LANE = 128
_CHUNK = 256                       # rows per inner step (mult. of 8/16/32/64)
_ACC_ROWS = 64                     # widened accumulator: 8 independent vregs
_MAX_BLOCK_BYTES = 4 * 1024 * 1024  # ~4 MiB DMA block amortizes step overhead
_FALLBACK_BYTES = 256 * 1024       # below this, plain XLA reduction wins


def _cdiv(a, b):
    return -(-a // b)


def _num_tensorcores():
    """Best-effort TensorCores-per-chip: 2 on v7x, 1 on v5e/v6e (and default)."""
    try:
        kind = jax.devices()[0].device_kind.lower()
    except Exception:
        return 1
    if "v7" in kind or "tpu7" in kind:
        return 2
    return 1


def _make_sumsq_kernel(tm, rows, bpc, nblocks, needs_mask):
    nchunks = tm // _CHUNK
    fold = _CHUNK // _ACC_ROWS
    # Blocks strictly below `last_full` are fully in-bounds and need no mask.
    last_full = nblocks if rows % tm == 0 else nblocks - 1

    def _block_sumsq(x_ref, mask_base):
        # mask_base: None on the fast path; else the element-row offset of
        # this block (blk * tm) for masking rows >= `rows`.
        def body(j, acc):
            r0 = pl.multiple_of(j * _CHUNK, _CHUNK)
            tile = x_ref[pl.ds(r0, _CHUNK), :].astype(jnp.float32)
            if mask_base is not None:
                rid = (jax.lax.broadcasted_iota(jnp.int32, (_CHUNK, _LANE), 0)
                       + mask_base + r0)
                tile = jnp.where(rid < rows, tile, 0.0)
            sq = tile * tile
            return acc + jnp.sum(sq.reshape(fold, _ACC_ROWS, _LANE), axis=0)

        init = jnp.zeros((_ACC_ROWS, _LANE), jnp.float32)
        return jax.lax.fori_loop(0, nchunks, body, init,
                                 unroll=min(nchunks, 8))

    def kernel(x_ref, o_ref):
        c = pl.program_id(0)
        i = pl.program_id(1)

        @pl.when(i == 0)
        def _():
            o_ref[...] = jnp.zeros_like(o_ref)

        if not needs_mask:
            # Lean path: no iota / compare / select anywhere in the hot loop.
            o_ref[...] += _block_sumsq(x_ref, None)
        else:
            blk = c * bpc + i

            if last_full > 0:
                @pl.when(blk < last_full)
                def _():
                    o_ref[...] += _block_sumsq(x_ref, None)

            @pl.when(blk >= last_full)
            def _():
                # Ragged last block (rows past `rows` are OOB garbage) and
                # clamped duplicate blocks on the 2-core path: mask to zero.
                o_ref[...] += _block_sumsq(x_ref, blk * tm)

    return kernel


def unit_log_mfg(x):
    """Pallas TPU implementation of -log(2*pi)*x.shape[1]/2 - sum(x**2)/2."""
    if x.ndim > 1:
        d = x.shape[1]
    elif x.ndim == 1:
        d = x.shape[0]
    else:
        d = 1
    const = jnp.float32(-math.log(2.0 * math.pi) * d / 2.0)

    if x.dtype == jnp.float64:          # TPU path accumulates in f32 anyway
        x = x.astype(jnp.float32)

    total = x.size
    itemsize = jnp.dtype(x.dtype).itemsize

    # Tiny inputs: one fused XLA reduction beats kernel-launch/grid overhead.
    if total == 0 or total * itemsize < _FALLBACK_BYTES:
        return const - 0.5 * jnp.sum(jnp.square(x.astype(jnp.float32)))

    flat = x.reshape(-1)                # zero-copy for contiguous inputs
    aligned = (total // _LANE) * _LANE
    tail_sumsq = jnp.float32(0.0)
    if aligned != total:
        # No full-array pad: the kernel streams the 128-aligned prefix, a
        # tiny XLA op reduces the <128-element tail.
        tail = jax.lax.slice(flat, (aligned,), (total,))
        tail_sumsq = jnp.sum(jnp.square(tail.astype(jnp.float32)))
        flat = jax.lax.slice(flat, (0,), (aligned,))

    rows = aligned // _LANE
    x2d = flat.reshape(rows, _LANE)     # lane-dense 2-D view

    ncores = _num_tensorcores()

    # Block rows: up to ~4 MiB per block, multiple of _CHUNK (covers the
    # 8/16/32 sublane packing of f32/bf16/int8), capped so every core still
    # sees at least ~2 blocks (keeps the pipeline / core split effective).
    max_tm = max(_CHUNK,
                 (_MAX_BLOCK_BYTES // (_LANE * itemsize)) // _CHUNK * _CHUNK)
    tm = min(max_tm,
             max(_CHUNK, (rows // (2 * ncores)) // _CHUNK * _CHUNK))

    nblocks = _cdiv(rows, tm)
    bpc = _cdiv(nblocks, ncores)                 # row-blocks per core
    dup = (ncores * bpc) != nblocks              # clamped duplicate blocks?
    ragged = (rows % tm) != 0                    # partial last block?
    needs_mask = dup or ragged

    if dup:
        def in_index(c, i):
            # Keep the DMA'd block index in range; duplicates are fully
            # masked inside the kernel and contribute zero.
            return (jnp.minimum(c * bpc + i, nblocks - 1), 0)
    else:
        def in_index(c, i):
            return (c * bpc + i, 0)

    blk_bytes = tm * _LANE * itemsize
    vmem_limit = int(min(64 << 20, max(16 << 20, 3 * blk_bytes + (2 << 20))))

    partials = pl.pallas_call(
        _make_sumsq_kernel(tm, rows, bpc, nblocks, needs_mask),
        out_shape=jax.ShapeDtypeStruct((ncores * _ACC_ROWS, _LANE),
                                       jnp.float32),
        grid=(ncores, bpc),
        in_specs=[pl.BlockSpec((tm, _LANE), in_index)],
        out_specs=pl.BlockSpec((_ACC_ROWS, _LANE), lambda c, i: (c, 0)),
        compiler_params=pltpu.CompilerParams(
            dimension_semantics=("parallel", "arbitrary"),
            vmem_limit_bytes=vmem_limit),
        cost_estimate=pl.CostEstimate(
            flops=2 * aligned,
            transcendentals=0,
            bytes_accessed=aligned * itemsize
            + ncores * _ACC_ROWS * _LANE * 4),
    )(x2d)

    # Single tiny final reduce (<= 128 x 128 f32) outside the hot loop.
    sumsq = jnp.sum(partials) + tail_sumsq
    return const - 0.5 * sumsq


if __name__ == "__main__":
    key = jax.random.PRNGKey(0)
    k1, k2, k3 = jax.random.split(key, 3)

    def ref_fn(x):
        d = x.shape[1] if x.ndim > 1 else x.shape[0]
        return (-jnp.log(2.0 * jnp.pi) * d / 2.0
                - 0.5 * jnp.sum(jnp.square(x.astype(jnp.float32))))

    # Small NCHW-style activation, consistent with how the module is fed
    # (takes the tiny-input XLA fast path).
    x1 = jax.random.normal(k1, (2, 4, 16, 16), dtype=jnp.float32)
    out1 = jax.block_until_ready(unit_log_mfg(x1))
    assert jnp.allclose(out1, ref_fn(x1), rtol=1e-5, atol=1e-5), (out1, ref_fn(x1))

    # Larger activation exercising the multi-block Pallas path.
    x2 = jax.random.normal(k2, (8, 16, 64, 64), dtype=jnp.float32)
    out2 = jax.block_until_ready(unit_log_mfg(x2))
    assert jnp.allclose(out2, ref_fn(x2), rtol=1e-4, atol=1e-2), (out2, ref_fn(x2))

    # Ragged size: exercises aligned-prefix kernel + masked last block + tail.
    x3 = jax.random.normal(k3, (67, 1001), dtype=jnp.float32)
    out3 = jax.block_until_ready(unit_log_mfg(x3))
    assert jnp.allclose(out3, ref_fn(x3), rtol=1e-4, atol=1e-2), (out3, ref_fn(x3))

    print("KERNEL_OK")
</pallas_src>

<mosaic_0001>
module attributes {stable_mosaic.version = 11 : i64} {
  func.func @kernel(%arg0: i32, %arg1: i32, %arg2: memref<2048x128xf32, #tpu.memory_space<vmem>>, %arg3: memref<64x128xf32, #tpu.memory_space<vmem>>) attributes {dimension_semantics = [#tpu.dimension_semantics<parallel>, #tpu.dimension_semantics<arbitrary>], iteration_bounds = array<i64: 1, 2>, scalar_prefetch = 0 : i64, scratch_operands = 0 : i64, tpu.core_type = #tpu.core_type<tc>, window_params = [{transform_indices = @transform_0, window_bounds = array<i64: 2048, 128>}, {transform_indices = @transform_1, window_bounds = array<i64: 64, 128>}]} {
    %c0_i32 = arith.constant 0 : i32
    %0 = arith.cmpi eq, %arg1, %c0_i32 : i32
    %1 = arith.extui %0 : i1 to i32
    %c0_i32_0 = arith.constant 0 : i32
    %2 = arith.cmpi ne, %1, %c0_i32_0 : i32
    scf.if %2 {
      %cst_28 = arith.constant 0.000000e+00 : f32
      %71 = vector.broadcast %cst_28 : f32 to vector<64x128xf32>
      %c0_29 = arith.constant 0 : index
      %c0_30 = arith.constant 0 : index
      %72 = vector.load %arg3[%c0_29, %c0_30] : memref<64x128xf32, #tpu.memory_space<vmem>>, vector<64x128xf32>
      tpu.vector_store %arg3[%c0_29, %c0_30], %71 {strides = array<i32>} : memref<64x128xf32, #tpu.memory_space<vmem>>, vector<64x128xf32>,
    } else {
    }
    %c0 = arith.constant 0 : index
    %c0_1 = arith.constant 0 : index
    %3 = vector.load %arg3[%c0, %c0_1] : memref<64x128xf32, #tpu.memory_space<vmem>>, vector<64x128xf32>
    %cst = arith.constant 0.000000e+00 : f32
    %4 = vector.broadcast %cst : f32 to vector<64x128xf32>
    %c0_i32_2 = arith.constant 0 : i32
    %c256_i32 = arith.constant 256 : i32
    %5 = arith.muli %c0_i32_2, %c256_i32 : i32
    %6 = tpu.assume_multiple %5, 256 : i32
    %7 = arith.index_cast %6 : i32 to index
    %c0_3 = arith.constant 0 : index
    %8 = vector.load %arg2[%7, %c0_3] : memref<2048x128xf32, #tpu.memory_space<vmem>>, vector<256x128xf32>
    %9 = arith.mulf %8, %8 : vector<256x128xf32>
    %10 = vector.shape_cast %9 : vector<256x128xf32> to vector<4x64x128xf32>
    %cst_4 = arith.constant dense<0.000000e+00> : vector<64x128xf32>
    %11 = vector.multi_reduction <add>, %10, %cst_4 [0] : vector<4x64x128xf32> to vector<64x128xf32>
    %12 = arith.addf %4, %11 : vector<64x128xf32>
    %c1_i32 = arith.constant 1 : i32
    %c256_i32_5 = arith.constant 256 : i32
    %13 = arith.muli %c1_i32, %c256_i32_5 : i32
    %14 = tpu.assume_multiple %13, 256 : i32
    %15 = arith.index_cast %14 : i32 to index
    %c0_6 = arith.constant 0 : index
    %16 = vector.load %arg2[%15, %c0_6] : memref<2048x128xf32, #tpu.memory_space<vmem>>, vector<256x128xf32>
    %17 = arith.mulf %16, %16 : vector<256x128xf32>
    %18 = vector.shape_cast %17 : vector<256x128xf32> to vector<4x64x128xf32>
    %cst_7 = arith.constant dense<0.000000e+00> : vector<64x128xf32>
    %19 = vector.multi_reduction <add>, %18, %cst_7 [0] : vector<4x64x128xf32> to vector<64x128xf32>
    %20 = arith.addf %12, %19 : vector<64x128xf32>
    %c2_i32 = arith.constant 2 : i32
    %c256_i32_8 = arith.constant 256 : i32
    %21 = arith.muli %c2_i32, %c256_i32_8 : i32
    %22 = tpu.assume_multiple %21, 256 : i32
    %23 = arith.index_cast %22 : i32 to index
    %c0_9 = arith.constant 0 : index
    %24 = vector.load %arg2[%23, %c0_9] : memref<2048x128xf32, #tpu.memory_space<vmem>>, vector<256x128xf32>
    %25 = arith.mulf %24, %24 : vector<256x128xf32>
    %26 = vector.shape_cast %25 : vector<256x128xf32> to vector<4x64x128xf32>
    %cst_10 = arith.constant dense<0.000000e+00> : vector<64x128xf32>
    %27 = vector.multi_reduction <add>, %26, %cst_10 [0] : vector<4x64x128xf32> to vector<64x128xf32>
    %28 = arith.addf %20, %27 : vector<64x128xf32>
    %c3_i32 = arith.constant 3 : i32
    %c256_i32_11 = arith.constant 256 : i32
    %29 = arith.muli %c3_i32, %c256_i32_11 : i32
    %30 = tpu.assume_multiple %29, 256 : i32
    %31 = arith.index_cast %30 : i32 to index
    %c0_12 = arith.constant 0 : index
    %32 = vector.load %arg2[%31, %c0_12] : memref<2048x128xf32, #tpu.memory_space<vmem>>, vector<256x128xf32>
    %33 = arith.mulf %32, %32 : vector<256x128xf32>
    %34 = vector.shape_cast %33 : vector<256x128xf32> to vector<4x64x128xf32>
    %cst_13 = arith.constant dense<0.000000e+00> : vector<64x128xf32>
    %35 = vector.multi_reduction <add>, %34, %cst_13 [0] : vector<4x64x128xf32> to vector<64x128xf32>
    %36 = arith.addf %28, %35 : vector<64x128xf32>
    %c4_i32 = arith.constant 4 : i32
    %c256_i32_14 = arith.constant 256 : i32
    %37 = arith.muli %c4_i32, %c256_i32_14 : i32
    %38 = tpu.assume_multiple %37, 256 : i32
    %39 = arith.index_cast %38 : i32 to index
    %c0_15 = arith.constant 0 : index
    %40 = vector.load %arg2[%39, %c0_15] : memref<2048x128xf32, #tpu.memory_space<vmem>>, vector<256x128xf32>
    %41 = arith.mulf %40, %40 : vector<256x128xf32>
    %42 = vector.shape_cast %41 : vector<256x128xf32> to vector<4x64x128xf32>
    %cst_16 = arith.constant dense<0.000000e+00> : vector<64x128xf32>
    %43 = vector.multi_reduction <add>, %42, %cst_16 [0] : vector<4x64x128xf32> to vector<64x128xf32>
    %44 = arith.addf %36, %43 : vector<64x128xf32>
    %c5_i32 = arith.constant 5 : i32
    %c256_i32_17 = arith.constant 256 : i32
    %45 = arith.muli %c5_i32, %c256_i32_17 : i32
    %46 = tpu.assume_multiple %45, 256 : i32
    %47 = arith.index_cast %46 : i32 to index
    %c0_18 = arith.constant 0 : index
    %48 = vector.load %arg2[%47, %c0_18] : memref<2048x128xf32, #tpu.memory_space<vmem>>, vector<256x128xf32>
    %49 = arith.mulf %48, %48 : vector<256x128xf32>
    %50 = vector.shape_cast %49 : vector<256x128xf32> to vector<4x64x128xf32>
    %cst_19 = arith.constant dense<0.000000e+00> : vector<64x128xf32>
    %51 = vector.multi_reduction <add>, %50, %cst_19 [0] : vector<4x64x128xf32> to vector<64x128xf32>
    %52 = arith.addf %44, %51 : vector<64x128xf32>
    %c6_i32 = arith.constant 6 : i32
    %c256_i32_20 = arith.constant 256 : i32
    %53 = arith.muli %c6_i32, %c256_i32_20 : i32
    %54 = tpu.assume_multiple %53, 256 : i32
    %55 = arith.index_cast %54 : i32 to index
    %c0_21 = arith.constant 0 : index
    %56 = vector.load %arg2[%55, %c0_21] : memref<2048x128xf32, #tpu.memory_space<vmem>>, vector<256x128xf32>
    %57 = arith.mulf %56, %56 : vector<256x128xf32>
    %58 = vector.shape_cast %57 : vector<256x128xf32> to vector<4x64x128xf32>
    %cst_22 = arith.constant dense<0.000000e+00> : vector<64x128xf32>
    %59 = vector.multi_reduction <add>, %58, %cst_22 [0] : vector<4x64x128xf32> to vector<64x128xf32>
    %60 = arith.addf %52, %59 : vector<64x128xf32>
    %c7_i32 = arith.constant 7 : i32
    %c256_i32_23 = arith.constant 256 : i32
    %61 = arith.muli %c7_i32, %c256_i32_23 : i32
    %62 = tpu.assume_multiple %61, 256 : i32
    %63 = arith.index_cast %62 : i32 to index
    %c0_24 = arith.constant 0 : index
    %64 = vector.load %arg2[%63, %c0_24] : memref<2048x128xf32, #tpu.memory_space<vmem>>, vector<256x128xf32>
    %65 = arith.mulf %64, %64 : vector<256x128xf32>
    %66 = vector.shape_cast %65 : vector<256x128xf32> to vector<4x64x128xf32>
    %cst_25 = arith.constant dense<0.000000e+00> : vector<64x128xf32>
    %67 = vector.multi_reduction <add>, %66, %cst_25 [0] : vector<4x64x128xf32> to vector<64x128xf32>
    %68 = arith.addf %60, %67 : vector<64x128xf32>
    %c8_i32 = arith.constant 8 : i32
    %69 = arith.addf %3, %68 : vector<64x128xf32>
    %c0_26 = arith.constant 0 : index
    %c0_27 = arith.constant 0 : index
    %70 = vector.load %arg3[%c0_26, %c0_27] : memref<64x128xf32, #tpu.memory_space<vmem>>, vector<64x128xf32>
    tpu.vector_store %arg3[%c0_26, %c0_27], %69 {strides = array<i32>} : memref<64x128xf32, #tpu.memory_space<vmem>>, vector<64x128xf32>,
    return
  }
  func.func @transform_0(%arg0: i32, %arg1: i32) -> (i32, i32) {
    %c2_i32 = arith.constant 2 : i32
    %0 = arith.muli %arg0, %c2_i32 : i32
    %1 = arith.addi %0, %arg1 : i32
    %c0_i32 = arith.constant 0 : i32
    %c0_i32_0 = arith.constant 0 : i32
    return %1, %c0_i32 : i32, i32
  }
  func.func @transform_1(%arg0: i32, %arg1: i32) -> (i32, i32) {
    %c0_i32 = arith.constant 0 : i32
    %c0_i32_0 = arith.constant 0 : i32
    return %arg0, %c0_i32 : i32, i32
  }
}

</mosaic_0001>

<llo_original>
// kernel: tpu_custom_call.1
$region0: #{tpu_custom_call.1}
  #allocation0 [shape = 'u32[]', space=smem, size = 0x4, offset = 0x4, fixed_abs, tag = 'smem constant byte address 0x4 - core index']
  #allocation1 [shape = 'u32[144,128]{1,0:T(1,128)}', space=vmem, size = 0x12000, scoped, tag = 'internal scratch']
  %s0 = inlined_call_operand.hbm [shape: f32[4096,128], index: 0, kind: input, shape index: {}]
  %s1 = inlined_call_operand.hbm [shape: f32[64,128], index: 1, kind: output, shape index: {}]
  %s2 = sld [smem:[#allocation0]]
  $region45: #{tpu_custom_call.1} parent=0
    _
  %s4 = ssub.s32 1, %s2
  %s5 = scalar_select 0, %s4, %s2
  $region1: #{tpu_custom_call.1} parent=0
    #allocation2 [shape = 'u8[2097152]{0}', space=vmem, size = 0x200000, scoped, tag = 'input window, operand 0']
    #allocation3 [shape = 's32[2]{0}', space=sflag, size = 0x8, scoped, tag = 'scoped memory for tpu_custom_call.1']
    #allocation4 [shape = 's32[2]{0}', space=sflag, size = 0x8, scoped, tag = 'scoped memory for tpu_custom_call.1']
    #allocation5 [shape = 'u8[32768]{0}', space=vmem, size = 0x8000, scoped, tag = 'output window, operand 0, single buffered']
    %6 = vsyncpa [#allocation3], 0
    %s7 = scalar_lea.sflag [#allocation3], 1
    %8 = vsyncpa %s7, 0
    %9 = vsyncpa [#allocation4], 0
    loop: start=0, step=1, limit=4
    $region2: #{tpu_custom_call.1} parent=1 // loop_pre_header
      _
    $region3: #{tpu_custom_call.1} parent=1 // loop_header
      %s11 = sphi 0, %s15
      %p12 = scmp.ge.s32.totalorder %s11, 4
      %s18 = sphi 0, %s30
      %s19 = sphi 0, %s26
      %s20 = sphi 0, %s18
      %s21 = sphi 0, %s19
      %s22 = sphi 0, %s20
      %s23 = sphi 0, %s21
      %s37 = sphi 0, %s39
      %s40 = sphi 0, %s37
      %s41 = sphi 0, %s40
      %s57 = sphi 0, %s41
      %s63 = sphi 0, %s65
      %s66 = sphi 0, %s63
      %s67 = sphi 0, %s66
      %s83 = sphi 0, %s67
    $region4: #{tpu_custom_call.1} parent=1 // loop_header_branch
      %14 = sbr.rel (%p12) target = $region8
    $region5: #{tpu_custom_call.1} parent=1 // loop_body
      %s16 = ssub.s32 %s11, 1
      %s17 = ssub.s32 %s11, 2
      %s24 = sadd.s32 1, %s19
      %p25 = scmp.ge.s32.totalorder %s24, 2
      %s26 = scalar_select %p25, 0, %s24
      %s27 = sadd.s32 1, %s18
      %s28 = scalar_select %p25, %s27, %s18
      %p29 = scmp.ge.s32.totalorder %s28, 1
      %s30 = scalar_select %p29, 0, %s28
      %s31 = smul.u32 %s18, 2
      %s32 = sadd.s32 %s31, %s19
      %s33 = smul.u32 %s30, 2
      %s34 = sadd.s32 %s33, %s26
      %s35 = ssub.s32 %s32, %s34
      %p36 = scmp.eq.s32.totalorder %s35, 0
      %s38 = sadd.s32 %s37, 1
      %s39 = scalar_select %p36, %s37, %s38
      %p42 = pneg %p36
      %p43 = scmp.eq.s32.totalorder %s11, 1
      %p44 = por %p42, %p43
      %p45 = scmp.ne.s32.totalorder %s37, %s40
      %p46 = scmp.eq.s32.totalorder %s11, 0
      %p47 = por %p45, %p46
      %p48 = scmp.ne.s32.totalorder %s37, %s40
      %p49 = scmp.eq.s32.totalorder %s16, 1
      %p50 = por %p48, %p49
      %p51 = scmp.ne.s32.totalorder %s40, %s41
      %p52 = scmp.eq.s32.totalorder %s16, 0
      %p53 = por %p51, %p52
      %p54 = scmp.ne.s32.totalorder %s40, %s41
      %p55 = scmp.eq.s32.totalorder %s17, 1
      %p56 = por %p54, %p55
      %p58 = scmp.ne.s32.totalorder %s41, %s57
      %p59 = scmp.eq.s32.totalorder %s17, 0
      %p60 = por %p58, %p59
      %s61 = ssub.s32 %s18, %s30
      %p62 = scmp.eq.s32.totalorder %s61, 0
      %s64 = sadd.s32 %s63, 1
      %s65 = scalar_select %p62, %s63, %s64
      %p68 = pneg %p62
      %p69 = scmp.eq.s32.totalorder %s11, 1
      %p70 = por %p68, %p69
      %p71 = scmp.ne.s32.totalorder %s63, %s66
      %p72 = scmp.eq.s32.totalorder %s11, 0
      %p73 = por %p71, %p72
      %p74 = scmp.ne.s32.totalorder %s63, %s66
      %p75 = scmp.eq.s32.totalorder %s16, 1
      %p76 = por %p74, %p75
      %p77 = scmp.ne.s32.totalorder %s66, %s67
      %p78 = scmp.eq.s32.totalorder %s16, 0
      %p79 = por %p77, %p78
      %p80 = scmp.ne.s32.totalorder %s66, %s67
      %p81 = scmp.eq.s32.totalorder %s17, 1
      %p82 = por %p80, %p81
      %p84 = scmp.ne.s32.totalorder %s67, %s83
      %p85 = scmp.eq.s32.totalorder %s17, 0
      %p86 = por %p84, %p85
      %p87 = scmp.le.s32.totalorder 1, %s11
      %p88 = scmp.lt.s32.totalorder %s11, 3
      %p89 = pnand %p87, %p88
      %p90 = pneg %p89
      // Predicated region
      $region9: #{tpu_custom_call.1} parent=5 // pred_check
        _
      $region10: #{tpu_custom_call.1} parent=5 // pred_check_branch
        %92 = sbr.rel (%p89) target = $region12
      $region11: #{tpu_custom_call.1} parent=5 // pred_region
        %s93 = ssub.s32 %s11, 1
      $region12: #{tpu_custom_call.1} parent=5 // pred_fallthru
        _
      %p94 = scmp.lt.s32.totalorder %s11, 2
      // Predicated region
      $region13: #{tpu_custom_call.1} parent=5 // pred_check
        %p95 = pneg %p94
      $region14: #{tpu_custom_call.1} parent=5 // pred_check_branch
        %97 = sbr.rel (%p95) target = $region16
      $region15: #{tpu_custom_call.1} parent=5 // pred_region
        // Predicated region
        $region17: #{tpu_custom_call.1} parent=15 // pred_check
          %p98 = pneg %p47
        $region18: #{tpu_custom_call.1} parent=15 // pred_check_branch
          %100 = sbr.rel (%p98) target = $region20
        $region19: #{tpu_custom_call.1} parent=15 // pred_region
          %s101 = sand.u32 %s37, 1
          %s102 = scalar_lea.sflag [#allocation3], %s101
          %s103 = sand.u32 %s37, 1
          %s104 = smul.addr %s103, 2048
          %s105 = scalar_lea.vmem [#allocation2], %s104
          %s106 = smul.u32 %s18, 2
          %s107 = sadd.s32 %s106, %s19
          %s108 = smul.u32 256, %s107
          %s110 = ssub.s32 32768, 32768
          %111 = vsyncadd %s102, %s110
          %s112 = smul.addr %s108, 128
          %s113 = scalar_lea.hbm %s0, %s112
          %s114 = sshll.u32 %s105, 4
          %s115 = int_to_ptr.vmem [resolvable:$true] %s114
          %120 = dma.hbm_to_vmem [thread:$0]  %s113, 32768, %s115, %s102, 128, 128, 8
        $region20: #{tpu_custom_call.1} parent=15 // pred_fallthru
          _
      $region16: #{tpu_custom_call.1} parent=5 // pred_fallthru
        _
      %p121 = scmp.le.s32.totalorder 1, %s11
      %p122 = scmp.lt.s32.totalorder %s11, 3
      %p123 = pnand %p121, %p122
      %p124 = pneg %p123
      // Predicated region
      $region21: #{tpu_custom_call.1} parent=5 // pred_check
        _
      $region22: #{tpu_custom_call.1} parent=5 // pred_check_branch
        %126 = sbr.rel (%p123) target = $region24
      $region23: #{tpu_custom_call.1} parent=5 // pred_region
        %s127 = ssub.s32 %s11, 1
        %s128 = sand.u32 %s40, 1
        %s129 = scalar_lea.sflag [#allocation3], %s128
        %s130 = sand.u32 %s40, 1
        %s131 = smul.addr %s130, 2048
        %s132 = scalar_lea.vmem [#allocation2], %s131
        // Predicated region
        $region25: #{tpu_custom_call.1} parent=23 // pred_check
          %p133 = pneg %p53
        $region26: #{tpu_custom_call.1} parent=23 // pred_check_branch
          %135 = sbr.rel (%p133) target = $region28
        $region27: #{tpu_custom_call.1} parent=23 // pred_region
          %136 = dma.done %s129, 32768
        $region28: #{tpu_custom_call.1} parent=23 // pred_fallthru
          _
        %s137 = sand.u32 %s40, 1
        %s138 = scalar_lea.sflag [#allocation3], %s137
        %s139 = sand.u32 %s40, 1
        %s140 = smul.addr %s139, 2048
        %s141 = scalar_lea.vmem [#allocation2], %s140
        %p142 = pneg %p53
        %p143 = pneg %p50
        %p144 = pneg %p79
        %p145 = pneg %p76
        %s146 = smul.u32 %s20, 2
        %s147 = sadd.s32 %s146, %s21
        %s148 = smul.u32 256, %s147
        %s149 = smul.u32 8, %s20
        %p150 = scmp.eq.s32.totalorder %s21, 0
        // Predicated region
        $region29: #{tpu_custom_call.1} parent=23 // pred_check
          %p151 = pneg %p150
        $region30: #{tpu_custom_call.1} parent=23 // pred_check_branch
          %153 = sbr.rel (%p151) target = $region32
        $region31: #{tpu_custom_call.1} parent=23 // pred_region
          %154 = vst [vmem:[#allocation5] sm:$0xff] 0.0
          %155 = vst [vmem:[#allocation5 + $0x8] sm:$0xff] 0.0
          %156 = vst [vmem:[#allocation5 + $0x10] sm:$0xff] 0.0
          %157 = vst [vmem:[#allocation5 + $0x18] sm:$0xff] 0.0
          %158 = vst [vmem:[#allocation5 + $0x20] sm:$0xff] 0.0
          %159 = vst [vmem:[#allocation5 + $0x28] sm:$0xff] 0.0
          %160 = vst [vmem:[#allocation5 + $0x30] sm:$0xff] 0.0
          %161 = vst [vmem:[#allocation5 + $0x38] sm:$0xff] 0.0
        $region32: #{tpu_custom_call.1} parent=23 // pred_fallthru
          _
        %v162 = vld [vmem:[#allocation5] sm:$0xff]
        %v163 = vld [vmem:[#allocation5 + $0x8] sm:$0xff]
        %v164 = vld [vmem:[#allocation5 + $0x10] sm:$0xff]
        %v165 = vld [vmem:[#allocation5 + $0x18] sm:$0xff]
        %v166 = vld [vmem:[#allocation5 + $0x20] sm:$0xff]
        %v167 = vld [vmem:[#allocation5 + $0x28] sm:$0xff]
        %v168 = vld [vmem:[#allocation5 + $0x30] sm:$0xff]
        %v169 = vld [vmem:[#allocation5 + $0x38] sm:$0xff]
        %v170 = vld [vmem:[%s132] sm:$0xff]
        %v171 = vld [vmem:[%s132 + $0x8] sm:$0xff]
        %v172 = vld [vmem:[%s132 + $0x10] sm:$0xff]
        %v173 = vld [vmem:[%s132 + $0x18] sm:$0xff]
        %v174 = vld [vmem:[%s132 + $0x20] sm:$0xff]
        %v175 = vld [vmem:[%s132 + $0x28] sm:$0xff]
        %v176 = vld [vmem:[%s132 + $0x30] sm:$0xff]
        %v177 = vld [vmem:[%s132 + $0x38] sm:$0xff]
        %v178 = vld [vmem:[%s132 + $0x40] sm:$0xff]
        %v179 = vld [vmem:[%s132 + $0x48] sm:$0xff]
        %v180 = vld [vmem:[%s132 + $0x50] sm:$0xff]
        %v181 = vld [vmem:[%s132 + $0x58] sm:$0xff]
        %v182 = vld [vmem:[%s132 + $0x60] sm:$0xff]
        %v183 = vld [vmem:[%s132 + $0x68] sm:$0xff]
        %v184 = vld [vmem:[%s132 + $0x70] sm:$0xff]
        %v185 = vld [vmem:[%s132 + $0x78] sm:$0xff]
        %v186 = vld [vmem:[%s132 + $0x80] sm:$0xff]
        %v187 = vld [vmem:[%s132 + $0x88] sm:$0xff]
        %v188 = vld [vmem:[%s132 + $0x90] sm:$0xff]
        %v189 = vld [vmem:[%s132 + $0x98] sm:$0xff]
        %v190 = vld [vmem:[%s132 + $0xa0] sm:$0xff]
        %v191 = vld [vmem:[%s132 + $0xa8] sm:$0xff]
        %v192 = vld [vmem:[%s132 + $0xb0] sm:$0xff]
        %v193 = vld [vmem:[%s132 + $0xb8] sm:$0xff]
        %v194 = vld [vmem:[%s132 + $0xc0] sm:$0xff]
        %v195 = vld [vmem:[%s132 + $0xc8] sm:$0xff]
        %v196 = vld [vmem:[%s132 + $0xd0] sm:$0xff]
        %v197 = vld [vmem:[%s132 + $0xd8] sm:$0xff]
        %v198 = vld [vmem:[%s132 + $0xe0] sm:$0xff]
        %v199 = vld [vmem:[%s132 + $0xe8] sm:$0xff]
        %v200 = vld [vmem:[%s132 + $0xf0] sm:$0xff]
        %v201 = vld [vmem:[%s132 + $0xf8] sm:$0xff]
        %v202 = vmul.f32 %v170, %v170
        %v203 = vmul.f32 %v171, %v171
        %v204 = vmul.f32 %v172, %v172
        %v205 = vmul.f32 %v173, %v173
        %v206 = vmul.f32 %v174, %v174
        %v207 = vmul.f32 %v175, %v175
        %v208 = vmul.f32 %v176, %v176
        %v209 = vmul.f32 %v177, %v177
        %v210 = vmul.f32 %v178, %v178
        %v211 = vmul.f32 %v179, %v179
        %v212 = vmul.f32 %v180, %v180
        %v213 = vmul.f32 %v181, %v181
        %v214 = vmul.f32 %v182, %v182
        %v215 = vmul.f32 %v183, %v183
        %v216 = vmul.f32 %v184, %v184
        %v217 = vmul.f32 %v185, %v185
        %v218 = vmul.f32 %v186, %v186
        %v219 = vmul.f32 %v187, %v187
        %v220 = vmul.f32 %v188, %v188
        %v221 = vmul.f32 %v189, %v189
        %v222 = vmul.f32 %v190, %v190
        %v223 = vmul.f32 %v191, %v191
        %v224 = vmul.f32 %v192, %v192
        %v225 = vmul.f32 %v193, %v193
        %v226 = vmul.f32 %v194, %v194
        %v227 = vmul.f32 %v195, %v195
        %v228 = vmul.f32 %v196, %v196
        %v229 = vmul.f32 %v197, %v197
        %v230 = vmul.f32 %v198, %v198
        %v231 = vmul.f32 %v199, %v199
        %v232 = vmul.f32 %v200, %v200
        %v233 = vmul.f32 %v201, %v201
        %v234 = vadd.f32 %v202, %v210
        %v235 = vadd.f32 %v234, %v218
        %v236 = vadd.f32 %v235, %v226
        %v237 = vadd.f32 %v203, %v211
        %v238 = vadd.f32 %v237, %v219
        %v239 = vadd.f32 %v238, %v227
        %v240 = vadd.f32 %v204, %v212
        %v241 = vadd.f32 %v240, %v220
        %v242 = vadd.f32 %v241, %v228
        %v243 = vadd.f32 %v205, %v213
        %v244 = vadd.f32 %v243, %v221
        %v245 = vadd.f32 %v244, %v229
        %v246 = vadd.f32 %v206, %v214
        %v247 = vadd.f32 %v246, %v222
        %v248 = vadd.f32 %v247, %v230
        %v249 = vadd.f32 %v207, %v215
        %v250 = vadd.f32 %v249, %v223
        %v251 = vadd.f32 %v250, %v231
        %v252 = vadd.f32 %v208, %v216
        %v253 = vadd.f32 %v252, %v224
        %v254 = vadd.f32 %v253, %v232
        %v255 = vadd.f32 %v209, %v217
        %v256 = vadd.f32 %v255, %v225
        %v257 = vadd.f32 %v256, %v233
        %v258 = vadd.f32 %v236, 0.0
        %v259 = vadd.f32 %v239, 0.0
        %v260 = vadd.f32 %v242, 0.0
        %v261 = vadd.f32 %v245, 0.0
        %v262 = vadd.f32 %v248, 0.0
        %v263 = vadd.f32 %v251, 0.0
        %v264 = vadd.f32 %v254, 0.0
        %v265 = vadd.f32 %v257, 0.0
        %s266 = scalar_lea.vmem %s132, 256 [#allocation2]
        %v267 = vld [vmem:[%s266] sm:$0xff]
        %v268 = vld [vmem:[%s266 + $0x8] sm:$0xff]
        %v269 = vld [vmem:[%s266 + $0x10] sm:$0xff]
        %v270 = vld [vmem:[%s266 + $0x18] sm:$0xff]
        %v271 = vld [vmem:[%s266 + $0x20] sm:$0xff]
        %v272 = vld [vmem:[%s266 + $0x28] sm:$0xff]
        %v273 = vld [vmem:[%s266 + $0x30] sm:$0xff]
        %v274 = vld [vmem:[%s266 + $0x38] sm:$0xff]
        %v275 = vld [vmem:[%s266 + $0x40] sm:$0xff]
        %v276 = vld [vmem:[%s266 + $0x48] sm:$0xff]
        %v277 = vld [vmem:[%s266 + $0x50] sm:$0xff]
        %v278 = vld [vmem:[%s266 + $0x58] sm:$0xff]
        %v279 = vld [vmem:[%s266 + $0x60] sm:$0xff]
        %v280 = vld [vmem:[%s266 + $0x68] sm:$0xff]
        %v281 = vld [vmem:[%s266 + $0x70] sm:$0xff]
        %v282 = vld [vmem:[%s266 + $0x78] sm:$0xff]
        %v283 = vld [vmem:[%s266 + $0x80] sm:$0xff]
        %v284 = vld [vmem:[%s266 + $0x88] sm:$0xff]
        %v285 = vld [vmem:[%s266 + $0x90] sm:$0xff]
        %v286 = vld [vmem:[%s266 + $0x98] sm:$0xff]
        %v287 = vld [vmem:[%s266 + $0xa0] sm:$0xff]
        %v288 = vld [vmem:[%s266 + $0xa8] sm:$0xff]
        %v289 = vld [vmem:[%s266 + $0xb0] sm:$0xff]
        %v290 = vld [vmem:[%s266 + $0xb8] sm:$0xff]
        %v291 = vld [vmem:[%s266 + $0xc0] sm:$0xff]
        %v292 = vld [vmem:[%s266 + $0xc8] sm:$0xff]
        %v293 = vld [vmem:[%s266 + $0xd0] sm:$0xff]
        %v294 = vld [vmem:[%s266 + $0xd8] sm:$0xff]
        %v295 = vld [vmem:[%s266 + $0xe0] sm:$0xff]
        %v296 = vld [vmem:[%s266 + $0xe8] sm:$0xff]
        %v297 = vld [vmem:[%s266 + $0xf0] sm:$0xff]
        %v298 = vld [vmem:[%s266 + $0xf8] sm:$0xff]
        %v299 = vmul.f32 %v267, %v267
        %v300 = vmul.f32 %v268, %v268
        %v301 = vmul.f32 %v269, %v269
        %v302 = vmul.f32 %v270, %v270
        %v303 = vmul.f32 %v271, %v271
        %v304 = vmul.f32 %v272, %v272
        %v305 = vmul.f32 %v273, %v273
        %v306 = vmul.f32 %v274, %v274
        %v307 = vmul.f32 %v275, %v275
        %v308 = vmul.f32 %v276, %v276
        %v309 = vmul.f32 %v277, %v277
        %v310 = vmul.f32 %v278, %v278
        %v311 = vmul.f32 %v279, %v279
        %v312 = vmul.f32 %v280, %v280
        %v313 = vmul.f32 %v281, %v281
        %v314 = vmul.f32 %v282, %v282
        %v315 = vmul.f32 %v283, %v283
        %v316 = vmul.f32 %v284, %v284
        %v317 = vmul.f32 %v285, %v285
        %v318 = vmul.f32 %v286, %v286
        %v319 = vmul.f32 %v287, %v287
        %v320 = vmul.f32 %v288, %v288
        %v321 = vmul.f32 %v289, %v289
        %v322 = vmul.f32 %v290, %v290
        %v323 = vmul.f32 %v291, %v291
        %v324 = vmul.f32 %v292, %v292
        %v325 = vmul.f32 %v293, %v293
        %v326 = vmul.f32 %v294, %v294
        %v327 = vmul.f32 %v295, %v295
        %v328 = vmul.f32 %v296, %v296
        %v329 = vmul.f32 %v297, %v297
        %v330 = vmul.f32 %v298, %v298
        %v331 = vadd.f32 %v299, %v307
        %v332 = vadd.f32 %v331, %v315
        %v333 = vadd.f32 %v332, %v323
        %v334 = vadd.f32 %v300, %v308
        %v335 = vadd.f32 %v334, %v316
        %v336 = vadd.f32 %v335, %v324
        %v337 = vadd.f32 %v301, %v309
        %v338 = vadd.f32 %v337, %v317
        %v339 = vadd.f32 %v338, %v325
        %v340 = vadd.f32 %v302, %v310
        %v341 = vadd.f32 %v340, %v318
        %v342 = vadd.f32 %v341, %v326
        %v343 = vadd.f32 %v303, %v311
        %v344 = vadd.f32 %v343, %v319
        %v345 = vadd.f32 %v344, %v327
        %v346 = vadd.f32 %v304, %v312
        %v347 = vadd.f32 %v346, %v320
        %v348 = vadd.f32 %v347, %v328
        %v349 = vadd.f32 %v305, %v313
        %v350 = vadd.f32 %v349, %v321
        %v351 = vadd.f32 %v350, %v329
        %v352 = vadd.f32 %v306, %v314
        %v353 = vadd.f32 %v352, %v322
        %v354 = vadd.f32 %v353, %v330
        %v355 = vadd.f32 %v258, %v333
        %v356 = vadd.f32 %v259, %v336
        %v357 = vadd.f32 %v260, %v339
        %v358 = vadd.f32 %v261, %v342
        %v359 = vadd.f32 %v262, %v345
        %v360 = vadd.f32 %v263, %v348
        %v361 = vadd.f32 %v264, %v351
        %v362 = vadd.f32 %v265, %v354
        %s363 = scalar_lea.vmem %s132, 512 [#allocation2]
        %v364 = vld [vmem:[%s363] sm:$0xff]
        %v365 = vld [vmem:[%s363 + $0x8] sm:$0xff]
        %v366 = vld [vmem:[%s363 + $0x10] sm:$0xff]
        %v367 = vld [vmem:[%s363 + $0x18] sm:$0xff]
        %v368 = vld [vmem:[%s363 + $0x20] sm:$0xff]
        %v369 = vld [vmem:[%s363 + $0x28] sm:$0xff]
        %v370 = vld [vmem:[%s363 + $0x30] sm:$0xff]
        %v371 = vld [vmem:[%s363 + $0x38] sm:$0xff]
        %v372 = vld [vmem:[%s363 + $0x40] sm:$0xff]
        %v373 = vld [vmem:[%s363 + $0x48] sm:$0xff]
        %v374 = vld [vmem:[%s363 + $0x50] sm:$0xff]
        %v375 = vld [vmem:[%s363 + $0x58] sm:$0xff]
        %v376 = vld [vmem:[%s363 + $0x60] sm:$0xff]
        %v377 = vld [vmem:[%s363 + $0x68] sm:$0xff]
        %v378 = vld [vmem:[%s363 + $0x70] sm:$0xff]
        %v379 = vld [vmem:[%s363 + $0x78] sm:$0xff]
        %v380 = vld [vmem:[%s363 + $0x80] sm:$0xff]
        %v381 = vld [vmem:[%s363 + $0x88] sm:$0xff]
        %v382 = vld [vmem:[%s363 + $0x90] sm:$0xff]
        %v383 = vld [vmem:[%s363 + $0x98] sm:$0xff]
        %v384 = vld [vmem:[%s363 + $0xa0] sm:$0xff]
        %v385 = vld [vmem:[%s363 + $0xa8] sm:$0xff]
        %v386 = vld [vmem:[%s363 + $0xb0] sm:$0xff]
        %v387 = vld [vmem:[%s363 + $0xb8] sm:$0xff]
        %v388 = vld [vmem:[%s363 + $0xc0] sm:$0xff]
        %v389 = vld [vmem:[%s363 + $0xc8] sm:$0xff]
        %v390 = vld [vmem:[%s363 + $0xd0] sm:$0xff]
        %v391 = vld [vmem:[%s363 + $0xd8] sm:$0xff]
        %v392 = vld [vmem:[%s363 + $0xe0] sm:$0xff]
        %v393 = vld [vmem:[%s363 + $0xe8] sm:$0xff]
        %v394 = vld [vmem:[%s363 + $0xf0] sm:$0xff]
        %v395 = vld [vmem:[%s363 + $0xf8] sm:$0xff]
        %v396 = vmul.f32 %v364, %v364
        %v397 = vmul.f32 %v365, %v365
        %v398 = vmul.f32 %v366, %v366
        %v399 = vmul.f32 %v367, %v367
        %v400 = vmul.f32 %v368, %v368
        %v401 = vmul.f32 %v369, %v369
        %v402 = vmul.f32 %v370, %v370
        %v403 = vmul.f32 %v371, %v371
        %v404 = vmul.f32 %v372, %v372
        %v405 = vmul.f32 %v373, %v373
        %v406 = vmul.f32 %v374, %v374
        %v407 = vmul.f32 %v375, %v375
        %v408 = vmul.f32 %v376, %v376
        %v409 = vmul.f32 %v377, %v377
        %v410 = vmul.f32 %v378, %v378
        %v411 = vmul.f32 %v379, %v379
        %v412 = vmul.f32 %v380, %v380
        %v413 = vmul.f32 %v381, %v381
        %v414 = vmul.f32 %v382, %v382
        %v415 = vmul.f32 %v383, %v383
        %v416 = vmul.f32 %v384, %v384
        %v417 = vmul.f32 %v385, %v385
        %v418 = vmul.f32 %v386, %v386
        %v419 = vmul.f32 %v387, %v387
        %v420 = vmul.f32 %v388, %v388
        %v421 = vmul.f32 %v389, %v389
        %v422 = vmul.f32 %v390, %v390
        %v423 = vmul.f32 %v391, %v391
        %v424 = vmul.f32 %v392, %v392
        %v425 = vmul.f32 %v393, %v393
        %v426 = vmul.f32 %v394, %v394
        %v427 = vmul.f32 %v395, %v395
        %v428 = vadd.f32 %v396, %v404
        %v429 = vadd.f32 %v428, %v412
        %v430 = vadd.f32 %v429, %v420
        %v431 = vadd.f32 %v397, %v405
        %v432 = vadd.f32 %v431, %v413
        %v433 = vadd.f32 %v432, %v421
        %v434 = vadd.f32 %v398, %v406
        %v435 = vadd.f32 %v434, %v414
        %v436 = vadd.f32 %v435, %v422
        %v437 = vadd.f32 %v399, %v407
        %v438 = vadd.f32 %v437, %v415
        %v439 = vadd.f32 %v438, %v423
        %v440 = vadd.f32 %v400, %v408
        %v441 = vadd.f32 %v440, %v416
        %v442 = vadd.f32 %v441, %v424
        %v443 = vadd.f32 %v401, %v409
        %v444 = vadd.f32 %v443, %v417
        %v445 = vadd.f32 %v444, %v425
        %v446 = vadd.f32 %v402, %v410
        %v447 = vadd.f32 %v446, %v418
        %v448 = vadd.f32 %v447, %v426
        %v449 = vadd.f32 %v403, %v411
        %v450 = vadd.f32 %v449, %v419
        %v451 = vadd.f32 %v450, %v427
        %v452 = vadd.f32 %v355, %v430
        %v453 = vadd.f32 %v356, %v433
        %v454 = vadd.f32 %v357, %v436
        %v455 = vadd.f32 %v358, %v439
        %v456 = vadd.f32 %v359, %v442
        %v457 = vadd.f32 %v360, %v445
        %v458 = vadd.f32 %v361, %v448
        %v459 = vadd.f32 %v362, %v451
        %s460 = scalar_lea.vmem %s132, 768 [#allocation2]
        %v461 = vld [vmem:[%s460] sm:$0xff]
        %v462 = vld [vmem:[%s460 + $0x8] sm:$0xff]
        %v463 = vld [vmem:[%s460 + $0x10] sm:$0xff]
        %v464 = vld [vmem:[%s460 + $0x18] sm:$0xff]
        %v465 = vld [vmem:[%s460 + $0x20] sm:$0xff]
        %v466 = vld [vmem:[%s460 + $0x28] sm:$0xff]
        %v467 = vld [vmem:[%s460 + $0x30] sm:$0xff]
        %v468 = vld [vmem:[%s460 + $0x38] sm:$0xff]
        %v469 = vld [vmem:[%s460 + $0x40] sm:$0xff]
        %v470 = vld [vmem:[%s460 + $0x48] sm:$0xff]
        %v471 = vld [vmem:[%s460 + $0x50] sm:$0xff]
        %v472 = vld [vmem:[%s460 + $0x58] sm:$0xff]
        %v473 = vld [vmem:[%s460 + $0x60] sm:$0xff]
        %v474 = vld [vmem:[%s460 + $0x68] sm:$0xff]
        %v475 = vld [vmem:[%s460 + $0x70] sm:$0xff]
        %v476 = vld [vmem:[%s460 + $0x78] sm:$0xff]
        %v477 = vld [vmem:[%s460 + $0x80] sm:$0xff]
        %v478 = vld [vmem:[%s460 + $0x88] sm:$0xff]
        %v479 = vld [vmem:[%s460 + $0x90] sm:$0xff]
        %v480 = vld [vmem:[%s460 + $0x98] sm:$0xff]
        %v481 = vld [vmem:[%s460 + $0xa0] sm:$0xff]
        %v482 = vld [vmem:[%s460 + $0xa8] sm:$0xff]
        %v483 = vld [vmem:[%s460 + $0xb0] sm:$0xff]
        %v484 = vld [vmem:[%s460 + $0xb8] sm:$0xff]
        %v485 = vld [vmem:[%s460 + $0xc0] sm:$0xff]
        %v486 = vld [vmem:[%s460 + $0xc8] sm:$0xff]
        %v487 = vld [vmem:[%s460 + $0xd0] sm:$0xff]
        %v488 = vld [vmem:[%s460 + $0xd8] sm:$0xff]
        %v489 = vld [vmem:[%s460 + $0xe0] sm:$0xff]
        %v490 = vld [vmem:[%s460 + $0xe8] sm:$0xff]
        %v491 = vld [vmem:[%s460 + $0xf0] sm:$0xff]
        %v492 = vld [vmem:[%s460 + $0xf8] sm:$0xff]
        %v493 = vmul.f32 %v461, %v461
        %v494 = vmul.f32 %v462, %v462
        %v495 = vmul.f32 %v463, %v463
        %v496 = vmul.f32 %v464, %v464
        %v497 = vmul.f32 %v465, %v465
        %v498 = vmul.f32 %v466, %v466
        %v499 = vmul.f32 %v467, %v467
        %v500 = vmul.f32 %v468, %v468
        %v501 = vmul.f32 %v469, %v469
        %v502 = vmul.f32 %v470, %v470
        %v503 = vmul.f32 %v471, %v471
        %v504 = vmul.f32 %v472, %v472
        %v505 = vmul.f32 %v473, %v473
        %v506 = vmul.f32 %v474, %v474
        %v507 = vmul.f32 %v475, %v475
        %v508 = vmul.f32 %v476, %v476
        %v509 = vmul.f32 %v477, %v477
        %v510 = vmul.f32 %v478, %v478
        %v511 = vmul.f32 %v479, %v479
        %v512 = vmul.f32 %v480, %v480
        %v513 = vmul.f32 %v481, %v481
        %v514 = vmul.f32 %v482, %v482
        %v515 = vmul.f32 %v483, %v483
        %v516 = vmul.f32 %v484, %v484
        %v517 = vmul.f32 %v485, %v485
        %v518 = vmul.f32 %v486, %v486
        %v519 = vmul.f32 %v487, %v487
        %v520 = vmul.f32 %v488, %v488
        %v521 = vmul.f32 %v489, %v489
        %v522 = vmul.f32 %v490, %v490
        %v523 = vmul.f32 %v491, %v491
        %v524 = vmul.f32 %v492, %v492
        %v525 = vadd.f32 %v493, %v501
        %v526 = vadd.f32 %v525, %v509
        %v527 = vadd.f32 %v526, %v517
        %v528 = vadd.f32 %v494, %v502
        %v529 = vadd.f32 %v528, %v510
        %v530 = vadd.f32 %v529, %v518
        %v531 = vadd.f32 %v495, %v503
        %v532 = vadd.f32 %v531, %v511
        %v533 = vadd.f32 %v532, %v519
        %v534 = vadd.f32 %v496, %v504
        %v535 = vadd.f32 %v534, %v512
        %v536 = vadd.f32 %v535, %v520
        %v537 = vadd.f32 %v497, %v505
        %v538 = vadd.f32 %v537, %v513
        %v539 = vadd.f32 %v538, %v521
        %v540 = vadd.f32 %v498, %v506
        %v541 = vadd.f32 %v540, %v514
        %v542 = vadd.f32 %v541, %v522
        %v543 = vadd.f32 %v499, %v507
        %v544 = vadd.f32 %v543, %v515
        %v545 = vadd.f32 %v544, %v523
        %v546 = vadd.f32 %v500, %v508
        %v547 = vadd.f32 %v546, %v516
        %v548 = vadd.f32 %v547, %v524
        %v549 = vadd.f32 %v452, %v527
        %v550 = vadd.f32 %v453, %v530
        %v551 = vadd.f32 %v454, %v533
        %v552 = vadd.f32 %v455, %v536
        %v553 = vadd.f32 %v456, %v539
        %v554 = vadd.f32 %v457, %v542
        %v555 = vadd.f32 %v458, %v545
        %v556 = vadd.f32 %v459, %v548
        %s557 = scalar_lea.vmem %s132, 1024 [#allocation2]
        %v558 = vld [vmem:[%s557] sm:$0xff]
        %v559 = vld [vmem:[%s557 + $0x8] sm:$0xff]
        %v560 = vld [vmem:[%s557 + $0x10] sm:$0xff]
        %v561 = vld [vmem:[%s557 + $0x18] sm:$0xff]
        %v562 = vld [vmem:[%s557 + $0x20] sm:$0xff]
        %v563 = vld [vmem:[%s557 + $0x28] sm:$0xff]
        %v564 = vld [vmem:[%s557 + $0x30] sm:$0xff]
        %v565 = vld [vmem:[%s557 + $0x38] sm:$0xff]
        %v566 = vld [vmem:[%s557 + $0x40] sm:$0xff]
        %v567 = vld [vmem:[%s557 + $0x48] sm:$0xff]
        %v568 = vld [vmem:[%s557 + $0x50] sm:$0xff]
        %v569 = vld [vmem:[%s557 + $0x58] sm:$0xff]
        %v570 = vld [vmem:[%s557 + $0x60] sm:$0xff]
        %v571 = vld [vmem:[%s557 + $0x68] sm:$0xff]
        %v572 = vld [vmem:[%s557 + $0x70] sm:$0xff]
        %v573 = vld [vmem:[%s557 + $0x78] sm:$0xff]
        %v574 = vld [vmem:[%s557 + $0x80] sm:$0xff]
        %v575 = vld [vmem:[%s557 + $0x88] sm:$0xff]
        %v576 = vld [vmem:[%s557 + $0x90] sm:$0xff]
        %v577 = vld [vmem:[%s557 + $0x98] sm:$0xff]
        %v578 = vld [vmem:[%s557 + $0xa0] sm:$0xff]
        %v579 = vld [vmem:[%s557 + $0xa8] sm:$0xff]
        %v580 = vld [vmem:[%s557 + $0xb0] sm:$0xff]
        %v581 = vld [vmem:[%s557 + $0xb8] sm:$0xff]
        %v582 = vld [vmem:[%s557 + $0xc0] sm:$0xff]
        %v583 = vld [vmem:[%s557 + $0xc8] sm:$0xff]
        %v584 = vld [vmem:[%s557 + $0xd0] sm:$0xff]
        %v585 = vld [vmem:[%s557 + $0xd8] sm:$0xff]
        %v586 = vld [vmem:[%s557 + $0xe0] sm:$0xff]
        %v587 = vld [vmem:[%s557 + $0xe8] sm:$0xff]
        %v588 = vld [vmem:[%s557 + $0xf0] sm:$0xff]
        %v589 = vld [vmem:[%s557 + $0xf8] sm:$0xff]
        %v590 = vmul.f32 %v558, %v558
        %v591 = vmul.f32 %v559, %v559
        %v592 = vmul.f32 %v560, %v560
        %v593 = vmul.f32 %v561, %v561
        %v594 = vmul.f32 %v562, %v562
        %v595 = vmul.f32 %v563, %v563
        %v596 = vmul.f32 %v564, %v564
        %v597 = vmul.f32 %v565, %v565
        %v598 = vmul.f32 %v566, %v566
        %v599 = vmul.f32 %v567, %v567
        %v600 = vmul.f32 %v568, %v568
        %v601 = vmul.f32 %v569, %v569
        %v602 = vmul.f32 %v570, %v570
        %v603 = vmul.f32 %v571, %v571
        %v604 = vmul.f32 %v572, %v572
        %v605 = vmul.f32 %v573, %v573
        %v606 = vmul.f32 %v574, %v574
        %v607 = vmul.f32 %v575, %v575
        %v608 = vmul.f32 %v576, %v576
        %v609 = vmul.f32 %v577, %v577
        %v610 = vmul.f32 %v578, %v578
        %v611 = vmul.f32 %v579, %v579
        %v612 = vmul.f32 %v580, %v580
        %v613 = vmul.f32 %v581, %v581
        %v614 = vmul.f32 %v582, %v582
        %v615 = vmul.f32 %v583, %v583
        %v616 = vmul.f32 %v584, %v584
        %v617 = vmul.f32 %v585, %v585
        %v618 = vmul.f32 %v586, %v586
        %v619 = vmul.f32 %v587, %v587
        %v620 = vmul.f32 %v588, %v588
        %v621 = vmul.f32 %v589, %v589
        %v622 = vadd.f32 %v590, %v598
        %v623 = vadd.f32 %v622, %v606
        %v624 = vadd.f32 %v623, %v614
        %v625 = vadd.f32 %v591, %v599
        %v626 = vadd.f32 %v625, %v607
        %v627 = vadd.f32 %v626, %v615
        %v628 = vadd.f32 %v592, %v600
        %v629 = vadd.f32 %v628, %v608
        %v630 = vadd.f32 %v629, %v616
        %v631 = vadd.f32 %v593, %v601
        %v632 = vadd.f32 %v631, %v609
        %v633 = vadd.f32 %v632, %v617
        %v634 = vadd.f32 %v594, %v602
        %v635 = vadd.f32 %v634, %v610
        %v636 = vadd.f32 %v635, %v618
        %v637 = vadd.f32 %v595, %v603
        %v638 = vadd.f32 %v637, %v611
        %v639 = vadd.f32 %v638, %v619
        %v640 = vadd.f32 %v596, %v604
        %v641 = vadd.f32 %v640, %v612
        %v642 = vadd.f32 %v641, %v620
        %v643 = vadd.f32 %v597, %v605
        %v644 = vadd.f32 %v643, %v613
        %v645 = vadd.f32 %v644, %v621
        %v646 = vadd.f32 %v549, %v624
        %v647 = vadd.f32 %v550, %v627
        %v648 = vadd.f32 %v551, %v630
        %v649 = vadd.f32 %v552, %v633
        %v650 = vadd.f32 %v553, %v636
        %v651 = vadd.f32 %v554, %v639
        %v652 = vadd.f32 %v555, %v642
        %v653 = vadd.f32 %v556, %v645
        %s654 = scalar_lea.vmem %s132, 1280 [#allocation2]
        %v655 = vld [vmem:[%s654] sm:$0xff]
        %v656 = vld [vmem:[%s654 + $0x8] sm:$0xff]
        %v657 = vld [vmem:[%s654 + $0x10] sm:$0xff]
        %v658 = vld [vmem:[%s654 + $0x18] sm:$0xff]
        %v659 = vld [vmem:[%s654 + $0x20] sm:$0xff]
        %v660 = vld [vmem:[%s654 + $0x28] sm:$0xff]
        %v661 = vld [vmem:[%s654 + $0x30] sm:$0xff]
        %v662 = vld [vmem:[%s654 + $0x38] sm:$0xff]
        %v663 = vld [vmem:[%s654 + $0x40] sm:$0xff]
        %v664 = vld [vmem:[%s654 + $0x48] sm:$0xff]
        %v665 = vld [vmem:[%s654 + $0x50] sm:$0xff]
        %v666 = vld [vmem:[%s654 + $0x58] sm:$0xff]
        %v667 = vld [vmem:[%s654 + $0x60] sm:$0xff]
        %v668 = vld [vmem:[%s654 + $0x68] sm:$0xff]
        %v669 = vld [vmem:[%s654 + $0x70] sm:$0xff]
        %v670 = vld [vmem:[%s654 + $0x78] sm:$0xff]
        %v671 = vld [vmem:[%s654 + $0x80] sm:$0xff]
        %v672 = vld [vmem:[%s654 + $0x88] sm:$0xff]
        %v673 = vld [vmem:[%s654 + $0x90] sm:$0xff]
        %v674 = vld [vmem:[%s654 + $0x98] sm:$0xff]
        %v675 = vld [vmem:[%s654 + $0xa0] sm:$0xff]
        %v676 = vld [vmem:[%s654 + $0xa8] sm:$0xff]
        %v677 = vld [vmem:[%s654 + $0xb0] sm:$0xff]
        %v678 = vld [vmem:[%s654 + $0xb8] sm:$0xff]
        %v679 = vld [vmem:[%s654 + $0xc0] sm:$0xff]
        %v680 = vld [vmem:[%s654 + $0xc8] sm:$0xff]
        %v681 = vld [vmem:[%s654 + $0xd0] sm:$0xff]
        %v682 = vld [vmem:[%s654 + $0xd8] sm:$0xff]
        %v683 = vld [vmem:[%s654 + $0xe0] sm:$0xff]
        %v684 = vld [vmem:[%s654 + $0xe8] sm:$0xff]
        %v685 = vld [vmem:[%s654 + $0xf0] sm:$0xff]
        %v686 = vld [vmem:[%s654 + $0xf8] sm:$0xff]
        %v687 = vmul.f32 %v655, %v655
        %v688 = vmul.f32 %v656, %v656
        %v689 = vmul.f32 %v657, %v657
        %v690 = vmul.f32 %v658, %v658
        %v691 = vmul.f32 %v659, %v659
        %v692 = vmul.f32 %v660, %v660
        %v693 = vmul.f32 %v661, %v661
        %v694 = vmul.f32 %v662, %v662
        %v695 = vmul.f32 %v663, %v663
        %v696 = vmul.f32 %v664, %v664
        %v697 = vmul.f32 %v665, %v665
        %v698 = vmul.f32 %v666, %v666
        %v699 = vmul.f32 %v667, %v667
        %v700 = vmul.f32 %v668, %v668
        %v701 = vmul.f32 %v669, %v669
        %v702 = vmul.f32 %v670, %v670
        %v703 = vmul.f32 %v671, %v671
        %v704 = vmul.f32 %v672, %v672
        %v705 = vmul.f32 %v673, %v673
        %v706 = vmul.f32 %v674, %v674
        %v707 = vmul.f32 %v675, %v675
        %v708 = vmul.f32 %v676, %v676
        %v709 = vmul.f32 %v677, %v677
        %v710 = vmul.f32 %v678, %v678
        %v711 = vmul.f32 %v679, %v679
        %v712 = vmul.f32 %v680, %v680
        %v713 = vmul.f32 %v681, %v681
        %v714 = vmul.f32 %v682, %v682
        %v715 = vmul.f32 %v683, %v683
        %v716 = vmul.f32 %v684, %v684
        %v717 = vmul.f32 %v685, %v685
        %v718 = vmul.f32 %v686, %v686
        %v719 = vadd.f32 %v687, %v695
        %v720 = vadd.f32 %v719, %v703
        %v721 = vadd.f32 %v720, %v711
        %v722 = vadd.f32 %v688, %v696
        %v723 = vadd.f32 %v722, %v704
        %v724 = vadd.f32 %v723, %v712
        %v725 = vadd.f32 %v689, %v697
        %v726 = vadd.f32 %v725, %v705
        %v727 = vadd.f32 %v726, %v713
        %v728 = vadd.f32 %v690, %v698
        %v729 = vadd.f32 %v728, %v706
        %v730 = vadd.f32 %v729, %v714
        %v731 = vadd.f32 %v691, %v699
        %v732 = vadd.f32 %v731, %v707
        %v733 = vadd.f32 %v732, %v715
        %v734 = vadd.f32 %v692, %v700
        %v735 = vadd.f32 %v734, %v708
        %v736 = vadd.f32 %v735, %v716
        %v737 = vadd.f32 %v693, %v701
        %v738 = vadd.f32 %v737, %v709
        %v739 = vadd.f32 %v738, %v717
        %v740 = vadd.f32 %v694, %v702
        %v741 = vadd.f32 %v740, %v710
        %v742 = vadd.f32 %v741, %v718
        %v743 = vadd.f32 %v646, %v721
        %v744 = vadd.f32 %v647, %v724
        %v745 = vadd.f32 %v648, %v727
        %v746 = vadd.f32 %v649, %v730
        %v747 = vadd.f32 %v650, %v733
        %v748 = vadd.f32 %v651, %v736
        %v749 = vadd.f32 %v652, %v739
        %v750 = vadd.f32 %v653, %v742
        %s751 = scalar_lea.vmem %s132, 1536 [#allocation2]
        %v752 = vld [vmem:[%s751] sm:$0xff]
        %v753 = vld [vmem:[%s751 + $0x8] sm:$0xff]
        %v754 = vld [vmem:[%s751 + $0x10] sm:$0xff]
        %v755 = vld [vmem:[%s751 + $0x18] sm:$0xff]
        %v756 = vld [vmem:[%s751 + $0x20] sm:$0xff]
        %v757 = vld [vmem:[%s751 + $0x28] sm:$0xff]
        %v758 = vld [vmem:[%s751 + $0x30] sm:$0xff]
        %v759 = vld [vmem:[%s751 + $0x38] sm:$0xff]
        %v760 = vld [vmem:[%s751 + $0x40] sm:$0xff]
        %v761 = vld [vmem:[%s751 + $0x48] sm:$0xff]
        %v762 = vld [vmem:[%s751 + $0x50] sm:$0xff]
        %v763 = vld [vmem:[%s751 + $0x58] sm:$0xff]
        %v764 = vld [vmem:[%s751 + $0x60] sm:$0xff]
        %v765 = vld [vmem:[%s751 + $0x68] sm:$0xff]
        %v766 = vld [vmem:[%s751 + $0x70] sm:$0xff]
        %v767 = vld [vmem:[%s751 + $0x78] sm:$0xff]
        %v768 = vld [vmem:[%s751 + $0x80] sm:$0xff]
        %v769 = vld [vmem:[%s751 + $0x88] sm:$0xff]
        %v770 = vld [vmem:[%s751 + $0x90] sm:$0xff]
        %v771 = vld [vmem:[%s751 + $0x98] sm:$0xff]
        %v772 = vld [vmem:[%s751 + $0xa0] sm:$0xff]
        %v773 = vld [vmem:[%s751 + $0xa8] sm:$0xff]
        %v774 = vld [vmem:[%s751 + $0xb0] sm:$0xff]
        %v775 = vld [vmem:[%s751 + $0xb8] sm:$0xff]
        %v776 = vld [vmem:[%s751 + $0xc0] sm:$0xff]
        %v777 = vld [vmem:[%s751 + $0xc8] sm:$0xff]
        %v778 = vld [vmem:[%s751 + $0xd0] sm:$0xff]
        %v779 = vld [vmem:[%s751 + $0xd8] sm:$0xff]
        %v780 = vld [vmem:[%s751 + $0xe0] sm:$0xff]
        %v781 = vld [vmem:[%s751 + $0xe8] sm:$0xff]
        %v782 = vld [vmem:[%s751 + $0xf0] sm:$0xff]
        %v783 = vld [vmem:[%s751 + $0xf8] sm:$0xff]
        %v784 = vmul.f32 %v752, %v752
        %v785 = vmul.f32 %v753, %v753
        %v786 = vmul.f32 %v754, %v754
        %v787 = vmul.f32 %v755, %v755
        %v788 = vmul.f32 %v756, %v756
        %v789 = vmul.f32 %v757, %v757
        %v790 = vmul.f32 %v758, %v758
        %v791 = vmul.f32 %v759, %v759
        %v792 = vmul.f32 %v760, %v760
        %v793 = vmul.f32 %v761, %v761
        %v794 = vmul.f32 %v762, %v762
        %v795 = vmul.f32 %v763, %v763
        %v796 = vmul.f32 %v764, %v764
        %v797 = vmul.f32 %v765, %v765
        %v798 = vmul.f32 %v766, %v766
        %v799 = vmul.f32 %v767, %v767
        %v800 = vmul.f32 %v768, %v768
        %v801 = vmul.f32 %v769, %v769
        %v802 = vmul.f32 %v770, %v770
        %v803 = vmul.f32 %v771, %v771
        %v804 = vmul.f32 %v772, %v772
        %v805 = vmul.f32 %v773, %v773
        %v806 = vmul.f32 %v774, %v774
        %v807 = vmul.f32 %v775, %v775
        %v808 = vmul.f32 %v776, %v776
        %v809 = vmul.f32 %v777, %v777
        %v810 = vmul.f32 %v778, %v778
        %v811 = vmul.f32 %v779, %v779
        %v812 = vmul.f32 %v780, %v780
        %v813 = vmul.f32 %v781, %v781
        %v814 = vmul.f32 %v782, %v782
        %v815 = vmul.f32 %v783, %v783
        %v816 = vadd.f32 %v784, %v792
        %v817 = vadd.f32 %v816, %v800
        %v818 = vadd.f32 %v817, %v808
        %v819 = vadd.f32 %v785, %v793
        %v820 = vadd.f32 %v819, %v801
        %v821 = vadd.f32 %v820, %v809
        %v822 = vadd.f32 %v786, %v794
        %v823 = vadd.f32 %v822, %v802
        %v824 = vadd.f32 %v823, %v810
        %v825 = vadd.f32 %v787, %v795
        %v826 = vadd.f32 %v825, %v803
        %v827 = vadd.f32 %v826, %v811
        %v828 = vadd.f32 %v788, %v796
        %v829 = vadd.f32 %v828, %v804
        %v830 = vadd.f32 %v829, %v812
        %v831 = vadd.f32 %v789, %v797
        %v832 = vadd.f32 %v831, %v805
        %v833 = vadd.f32 %v832, %v813
        %v834 = vadd.f32 %v790, %v798
        %v835 = vadd.f32 %v834, %v806
        %v836 = vadd.f32 %v835, %v814
        %v837 = vadd.f32 %v791, %v799
        %v838 = vadd.f32 %v837, %v807
        %v839 = vadd.f32 %v838, %v815
        %v840 = vadd.f32 %v743, %v818
        %v841 = vadd.f32 %v744, %v821
        %v842 = vadd.f32 %v745, %v824
        %v843 = vadd.f32 %v746, %v827
        %v844 = vadd.f32 %v747, %v830
        %v845 = vadd.f32 %v748, %v833
        %v846 = vadd.f32 %v749, %v836
        %v847 = vadd.f32 %v750, %v839
        %s848 = scalar_lea.vmem %s132, 1792 [#allocation2]
        %v849 = vld [vmem:[%s848] sm:$0xff]
        %v850 = vld [vmem:[%s848 + $0x8] sm:$0xff]
        %v851 = vld [vmem:[%s848 + $0x10] sm:$0xff]
        %v852 = vld [vmem:[%s848 + $0x18] sm:$0xff]
        %v853 = vld [vmem:[%s848 + $0x20] sm:$0xff]
        %v854 = vld [vmem:[%s848 + $0x28] sm:$0xff]
        %v855 = vld [vmem:[%s848 + $0x30] sm:$0xff]
        %v856 = vld [vmem:[%s848 + $0x38] sm:$0xff]
        %v857 = vld [vmem:[%s848 + $0x40] sm:$0xff]
        %v858 = vld [vmem:[%s848 + $0x48] sm:$0xff]
        %v859 = vld [vmem:[%s848 + $0x50] sm:$0xff]
        %v860 = vld [vmem:[%s848 + $0x58] sm:$0xff]
        %v861 = vld [vmem:[%s848 + $0x60] sm:$0xff]
        %v862 = vld [vmem:[%s848 + $0x68] sm:$0xff]
        %v863 = vld [vmem:[%s848 + $0x70] sm:$0xff]
        %v864 = vld [vmem:[%s848 + $0x78] sm:$0xff]
        %v865 = vld [vmem:[%s848 + $0x80] sm:$0xff]
        %v866 = vld [vmem:[%s848 + $0x88] sm:$0xff]
        %v867 = vld [vmem:[%s848 + $0x90] sm:$0xff]
        %v868 = vld [vmem:[%s848 + $0x98] sm:$0xff]
        %v869 = vld [vmem:[%s848 + $0xa0] sm:$0xff]
        %v870 = vld [vmem:[%s848 + $0xa8] sm:$0xff]
        %v871 = vld [vmem:[%s848 + $0xb0] sm:$0xff]
        %v872 = vld [vmem:[%s848 + $0xb8] sm:$0xff]
        %v873 = vld [vmem:[%s848 + $0xc0] sm:$0xff]
        %v874 = vld [vmem:[%s848 + $0xc8] sm:$0xff]
        %v875 = vld [vmem:[%s848 + $0xd0] sm:$0xff]
        %v876 = vld [vmem:[%s848 + $0xd8] sm:$0xff]
        %v877 = vld [vmem:[%s848 + $0xe0] sm:$0xff]
        %v878 = vld [vmem:[%s848 + $0xe8] sm:$0xff]
        %v879 = vld [vmem:[%s848 + $0xf0] sm:$0xff]
        %v880 = vld [vmem:[%s848 + $0xf8] sm:$0xff]
        %v881 = vmul.f32 %v849, %v849
        %v882 = vmul.f32 %v850, %v850
        %v883 = vmul.f32 %v851, %v851
        %v884 = vmul.f32 %v852, %v852
        %v885 = vmul.f32 %v853, %v853
        %v886 = vmul.f32 %v854, %v854
        %v887 = vmul.f32 %v855, %v855
        %v888 = vmul.f32 %v856, %v856
        %v889 = vmul.f32 %v857, %v857
        %v890 = vmul.f32 %v858, %v858
        %v891 = vmul.f32 %v859, %v859
        %v892 = vmul.f32 %v860, %v860
        %v893 = vmul.f32 %v861, %v861
        %v894 = vmul.f32 %v862, %v862
        %v895 = vmul.f32 %v863, %v863
        %v896 = vmul.f32 %v864, %v864
        %v897 = vmul.f32 %v865, %v865
        %v898 = vmul.f32 %v866, %v866
        %v899 = vmul.f32 %v867, %v867
        %v900 = vmul.f32 %v868, %v868
        %v901 = vmul.f32 %v869, %v869
        %v902 = vmul.f32 %v870, %v870
        %v903 = vmul.f32 %v871, %v871
        %v904 = vmul.f32 %v872, %v872
        %v905 = vmul.f32 %v873, %v873
        %v906 = vmul.f32 %v874, %v874
        %v907 = vmul.f32 %v875, %v875
        %v908 = vmul.f32 %v876, %v876
        %v909 = vmul.f32 %v877, %v877
        %v910 = vmul.f32 %v878, %v878
        %v911 = vmul.f32 %v879, %v879
        %v912 = vmul.f32 %v880, %v880
        %v913 = vadd.f32 %v881, %v889
        %v914 = vadd.f32 %v913, %v897
        %v915 = vadd.f32 %v914, %v905
        %v916 = vadd.f32 %v882, %v890
        %v917 = vadd.f32 %v916, %v898
        %v918 = vadd.f32 %v917, %v906
        %v919 = vadd.f32 %v883, %v891
        %v920 = vadd.f32 %v919, %v899
        %v921 = vadd.f32 %v920, %v907
        %v922 = vadd.f32 %v884, %v892
        %v923 = vadd.f32 %v922, %v900
        %v924 = vadd.f32 %v923, %v908
        %v925 = vadd.f32 %v885, %v893
        %v926 = vadd.f32 %v925, %v901
        %v927 = vadd.f32 %v926, %v909
        %v928 = vadd.f32 %v886, %v894
        %v929 = vadd.f32 %v928, %v902
        %v930 = vadd.f32 %v929, %v910
        %v931 = vadd.f32 %v887, %v895
        %v932 = vadd.f32 %v931, %v903
        %v933 = vadd.f32 %v932, %v911
        %v934 = vadd.f32 %v888, %v896
        %v935 = vadd.f32 %v934, %v904
        %v936 = vadd.f32 %v935, %v912
        %v937 = vadd.f32 %v840, %v915
        %v938 = vadd.f32 %v841, %v918
        %v939 = vadd.f32 %v842, %v921
        %v940 = vadd.f32 %v843, %v924
        %v941 = vadd.f32 %v844, %v927
        %v942 = vadd.f32 %v845, %v930
        %v943 = vadd.f32 %v846, %v933
        %v944 = vadd.f32 %v847, %v936
        %v945 = vadd.f32 %v162, %v937
        %v946 = vadd.f32 %v163, %v938
        %v947 = vadd.f32 %v164, %v939
        %v948 = vadd.f32 %v165, %v940
        %v949 = vadd.f32 %v166, %v941
        %v950 = vadd.f32 %v167, %v942
        %v951 = vadd.f32 %v168, %v943
        %v952 = vadd.f32 %v169, %v944
        %953 = vst [vmem:[#allocation5] sm:$0xff] %v945
        %954 = vst [vmem:[#allocation5 + $0x8] sm:$0xff] %v946
        %955 = vst [vmem:[#allocation5 + $0x10] sm:$0xff] %v947
        %956 = vst [vmem:[#allocation5 + $0x18] sm:$0xff] %v948
        %957 = vst [vmem:[#allocation5 + $0x20] sm:$0xff] %v949
        %958 = vst [vmem:[#allocation5 + $0x28] sm:$0xff] %v950
        %959 = vst [vmem:[#allocation5 + $0x30] sm:$0xff] %v951
        %960 = vst [vmem:[#allocation5 + $0x38] sm:$0xff] %v952
        // Predicated region
        $region33: #{tpu_custom_call.1} parent=23 // pred_check
          %p961 = pneg %p76
        $region34: #{tpu_custom_call.1} parent=23 // pred_check_branch
          %963 = sbr.rel (%p961) target = $region36
        $region35: #{tpu_custom_call.1} parent=23 // pred_region
          %s964 = smul.u32 8, %s20
          %s966 = ssub.s32 1024, 1024
          %967 = vsyncadd [#allocation4], %s966
          %s968 = smul.addr %s964, 128
          %s969 = scalar_lea.hbm %s1, %s968
          %s970 = sshll.u32 [#allocation5], 4
          %s971 = int_to_ptr.vmem [resolvable:$true] %s970
          %976 = dma.vmem_to_hbm [thread:$0]  %s971, 1024, %s969, [#allocation4], 128, 128, 8
        $region36: #{tpu_custom_call.1} parent=23 // pred_fallthru
          _
        // Predicated region
        $region37: #{tpu_custom_call.1} parent=23 // pred_check
          %p977 = pneg %p76
        $region38: #{tpu_custom_call.1} parent=23 // pred_check_branch
          %979 = sbr.rel (%p977) target = $region40
        $region39: #{tpu_custom_call.1} parent=23 // pred_region
          %980 = dma.done [#allocation4], 1024
        $region40: #{tpu_custom_call.1} parent=23 // pred_fallthru
          _
      $region24: #{tpu_custom_call.1} parent=5 // pred_fallthru
        _
      %p981 = scmp.le.s32.totalorder 2, %s11
      // Predicated region
      $region41: #{tpu_custom_call.1} parent=5 // pred_check
        %p982 = pneg %p981
      $region42: #{tpu_custom_call.1} parent=5 // pred_check_branch
        %984 = sbr.rel (%p982) target = $region44
      $region43: #{tpu_custom_call.1} parent=5 // pred_region
        %s985 = ssub.s32 %s11, 2
      $region44: #{tpu_custom_call.1} parent=5 // pred_fallthru
        _
    $region6: #{tpu_custom_call.1} parent=1 // loop_footer
      %s15 = sadd.s32 1, %s11
    $region7: #{tpu_custom_call.1} parent=1 // loop_footer_branch
      %10 = sbr.rel target = $region3
    $region8: #{tpu_custom_call.1} parent=1 // loop_exit
      _
    %986 = vsyncpa [#allocation3], 1
    %s987 = scalar_lea.sflag [#allocation3], 1
    %988 = vsyncpa %s987, 1
    %989 = vsyncpa [#allocation4], 1
    %s990 = scalar_lea.sflag [#allocation4], 1
    %991 = vsyncpa %s990, 1

</llo_original>
